<compile_context>
chip_gen: v5e
topology: v5e:2x2
jax: 0.10.0
libtpu: 0.0.40
codegen_flags: <defaults>
</compile_context>

<pallas_src>
import jax
import jax.numpy as jnp
from jax.experimental import pallas as pl
from jax.experimental.pallas import tpu as pltpu


def _transpose_kernel(x_ref, o_ref):
    # x_ref: (TS, TH) VMEM tile; o_ref: (TH, TS) VMEM tile.
    o_ref[...] = x_ref[...].T  # lane<->sublane transpose on the XLU


def _tile_target(itemsize: int) -> int:
    """Largest square-ish tile edge (multiple of 128) keeping the pipelined
    working set (2 buffers x (in tile + out tile)) around <= 8 MiB."""
    budget = 8 * 1024 * 1024
    t = int((budget // (4 * itemsize)) ** 0.5)
    return max(128, (t // 128) * 128)


def _pick_tile(dim: int, target: int) -> int:
    """Pick a tile size for `dim`:
      * full extent if the dim is small (always BlockSpec-legal),
      * otherwise the largest multiple of 128 <= target that evenly divides
        dim (no padded boundary blocks),
      * otherwise (ragged large dim) the largest multiple of 128 <= target;
        the grid then uses pl.cdiv and Pallas masks the boundary block."""
    if dim <= target:
        return dim
    t = (target // 128) * 128
    while t >= 128:
        if dim % t == 0:
            return t
        t -= 128
    return (target // 128) * 128


def transpose_1_2(x):
    """Pallas equivalent of torch.Tensor.transpose(1, 2) for a 3-D input."""
    B, S, H = x.shape
    itemsize = jnp.dtype(x.dtype).itemsize

    target = _tile_target(itemsize)
    TS = _pick_tile(S, target)
    TH = _pick_tile(H, target)

    # Pipelined VMEM working set: double-buffered input + output tiles.
    working_set = 2 * (TS * TH + TH * TS) * itemsize
    vmem_limit = int(min(64 << 20, max(16 << 20, 2 * working_set)))

    out_shape = jax.ShapeDtypeStruct((B, H, S), x.dtype)

    return pl.pallas_call(
        _transpose_kernel,
        out_shape=out_shape,
        grid_spec=pltpu.PrefetchScalarGridSpec(
            num_scalar_prefetch=0,
            grid=(B, pl.cdiv(S, TS), pl.cdiv(H, TH)),
            in_specs=[
                # batch dim squeezed -> kernel ref is (TS, TH)
                pl.BlockSpec((pl.Squeezed(), TS, TH), lambda b, i, j: (b, i, j)),
            ],
            # output tile is the transposed tile at swapped block coords
            out_specs=pl.BlockSpec((pl.Squeezed(), TH, TS), lambda b, i, j: (b, j, i)),
        ),
        compiler_params=pltpu.CompilerParams(
            dimension_semantics=("parallel", "parallel", "parallel"),
            vmem_limit_bytes=vmem_limit,
        ),
        cost_estimate=pl.CostEstimate(
            flops=0,
            transcendentals=0,
            bytes_accessed=2 * B * S * H * itemsize,
        ),
    )(x)


if __name__ == "__main__":
    key = jax.random.PRNGKey(0)

    # Small shape consistent with the module's typical (batch, seq, hidden) use.
    B, S, H = 2, 8, 32
    x = jax.random.normal(key, (B, S, H), dtype=jnp.float32)
    y = jax.block_until_ready(transpose_1_2(x))
    y_ref = jnp.swapaxes(x, 1, 2)
    assert y.shape == (B, H, S), y.shape
    assert jnp.array_equal(y, y_ref), "mismatch vs reference transpose (small)"

    # Moderate shape that exercises the tiled (B, S-tiles, H-tiles) grid with
    # evenly dividing 128-multiple tiles.
    x2 = jax.random.normal(jax.random.PRNGKey(0), (1, 1024, 768), dtype=jnp.float32)
    y2 = jax.block_until_ready(transpose_1_2(x2))
    assert jnp.array_equal(y2, jnp.swapaxes(x2, 1, 2)), "mismatch vs reference (tiled)"

    # Ragged large dim: exercises the cdiv grid + masked boundary block path.
    x3 = jax.random.normal(jax.random.PRNGKey(0), (1, 1030, 640), dtype=jnp.float32)
    y3 = jax.block_until_ready(transpose_1_2(x3))
    assert jnp.array_equal(y3, jnp.swapaxes(x3, 1, 2)), "mismatch vs reference (ragged)"

    print("KERNEL_OK")
</pallas_src>

<mosaic_0001>
module attributes {stable_mosaic.version = 11 : i64} {
  func.func @_transpose_kernel(%arg0: i32, %arg1: i32, %arg2: i32, %arg3: memref<1x8x32xf32, #tpu.memory_space<vmem>>, %arg4: memref<1x32x8xf32, #tpu.memory_space<vmem>>) attributes {dimension_semantics = [#tpu.dimension_semantics<parallel>, #tpu.dimension_semantics<parallel>, #tpu.dimension_semantics<parallel>], iteration_bounds = array<i64: 2, 1, 1>, scalar_prefetch = 0 : i64, scratch_operands = 0 : i64, tpu.core_type = #tpu.core_type<tc>, window_params = [{transform_indices = @transform_0, window_bounds = array<i64: 1, 8, 32>}, {transform_indices = @transform_1, window_bounds = array<i64: 1, 32, 8>}]} {
    %c0 = arith.constant 0 : index
    %c0_0 = arith.constant 0 : index
    %c0_1 = arith.constant 0 : index
    %0 = vector.load %arg3[%c0, %c0_0, %c0_1] : memref<1x8x32xf32, #tpu.memory_space<vmem>>, vector<1x8x32xf32>
    %1 = vector.shape_cast %0 : vector<1x8x32xf32> to vector<8x32xf32>
    %2 = tpu.transpose %1, [1, 0] : vector<8x32xf32> -> vector<32x8xf32>
    %c0_2 = arith.constant 0 : index
    %c0_3 = arith.constant 0 : index
    %c0_4 = arith.constant 0 : index
    %3 = vector.load %arg4[%c0_2, %c0_3, %c0_4] : memref<1x32x8xf32, #tpu.memory_space<vmem>>, vector<1x32x8xf32>
    %4 = vector.shape_cast %3 : vector<1x32x8xf32> to vector<32x8xf32>
    %5 = vector.shape_cast %2 : vector<32x8xf32> to vector<1x32x8xf32>
    tpu.vector_store %arg4[%c0_2, %c0_3, %c0_4], %5 {strides = array<i32>} : memref<1x32x8xf32, #tpu.memory_space<vmem>>, vector<1x32x8xf32>,
    return
  }
  func.func @transform_0(%arg0: i32, %arg1: i32, %arg2: i32) -> (i32, i32, i32) {
    %c0_i32 = arith.constant 0 : i32
    return %arg0, %arg1, %arg2 : i32, i32, i32
  }
  func.func @transform_1(%arg0: i32, %arg1: i32, %arg2: i32) -> (i32, i32, i32) {
    %c0_i32 = arith.constant 0 : i32
    return %arg0, %arg2, %arg1 : i32, i32, i32
  }
}

</mosaic_0001>

<llo_original>
// kernel: tpu_custom_call.1
$region0: #{tpu_custom_call.1}
  #allocation0 [shape = 'u32[]', space=smem, size = 0x4, offset = 0x4, fixed_abs, tag = 'smem constant byte address 0x4 - core index']
  #allocation1 [shape = 'u32[72,128]{1,0:T(1,128)}', space=vmem, size = 0x9000, scoped, tag = 'internal scratch']
  %s0 = inlined_call_operand.hbm [shape: f32[2,8,32], index: 0, kind: input, shape index: {}]
  %s1 = inlined_call_operand.vmem [shape: f32[2,32,8], index: 1, kind: output, shape index: {}]
  %s2 = sld [smem:[#allocation0]]
  $region41: #{tpu_custom_call.1} parent=0
    _
  %s4 = ssub.s32 1, %s2
  %s5 = scalar_select 0, %s4, %s2
  $region1: #{tpu_custom_call.1} parent=0
    #allocation2 [shape = 'u8[8192]{0}', space=vmem, size = 0x2000, scoped, tag = 'input window, operand 0']
    #allocation3 [shape = 's32[2]{0}', space=sflag, size = 0x8, scoped, tag = 'scoped memory for tpu_custom_call.1']
    %6 = vsyncpa [#allocation3], 0
    %s7 = scalar_lea.sflag [#allocation3], 1
    %8 = vsyncpa %s7, 0
    loop: start=0, step=1, limit=4
    $region2: #{tpu_custom_call.1} parent=1 // loop_pre_header
      _
    $region3: #{tpu_custom_call.1} parent=1 // loop_header
      %s10 = sphi 0, %s14
      %p11 = scmp.ge.s32.totalorder %s10, 4
      %s17 = sphi 0, %s36
      %s18 = sphi 0, %s32
      %s19 = sphi 0, %s28
      %s20 = sphi 0, %s17
      %s21 = sphi 0, %s18
      %s22 = sphi 0, %s19
      %s23 = sphi 0, %s20
      %s24 = sphi 0, %s21
      %s25 = sphi 0, %s22
      %s43 = sphi 0, %s45
      %s46 = sphi 0, %s43
      %s47 = sphi 0, %s46
      %s63 = sphi 0, %s47
      %s73 = sphi 0, %s75
      %s76 = sphi 0, %s73
      %s77 = sphi 0, %s76
      %s93 = sphi 0, %s77
    $region4: #{tpu_custom_call.1} parent=1 // loop_header_branch
      %13 = sbr.rel (%p11) target = $region8
    $region5: #{tpu_custom_call.1} parent=1 // loop_body
      %s15 = ssub.s32 %s10, 1
      %s16 = ssub.s32 %s10, 2
      %s26 = sadd.s32 1, %s19
      %p27 = scmp.ge.s32.totalorder %s26, 1
      %s28 = scalar_select %p27, 0, %s26
      %s29 = sadd.s32 1, %s18
      %s30 = scalar_select %p27, %s29, %s18
      %p31 = scmp.ge.s32.totalorder %s30, 1
      %s32 = scalar_select %p31, 0, %s30
      %s33 = sadd.s32 1, %s17
      %s34 = scalar_select %p31, %s33, %s17
      %p35 = scmp.ge.s32.totalorder %s34, 2
      %s36 = scalar_select %p35, 0, %s34
      %s37 = ssub.s32 %s17, %s36
      %s38 = ssub.s32 %s18, %s32
      %s39 = sor.u32 %s37, %s38
      %s40 = ssub.s32 %s19, %s28
      %s41 = sor.u32 %s39, %s40
      %p42 = scmp.eq.s32.totalorder %s41, 0
      %s44 = sadd.s32 %s43, 1
      %s45 = scalar_select %p42, %s43, %s44
      %p48 = pneg %p42
      %p49 = scmp.eq.s32.totalorder %s10, 1
      %p50 = por %p48, %p49
      %p51 = scmp.ne.s32.totalorder %s43, %s46
      %p52 = scmp.eq.s32.totalorder %s10, 0
      %p53 = por %p51, %p52
      %p54 = scmp.ne.s32.totalorder %s43, %s46
      %p55 = scmp.eq.s32.totalorder %s15, 1
      %p56 = por %p54, %p55
      %p57 = scmp.ne.s32.totalorder %s46, %s47
      %p58 = scmp.eq.s32.totalorder %s15, 0
      %p59 = por %p57, %p58
      %p60 = scmp.ne.s32.totalorder %s46, %s47
      %p61 = scmp.eq.s32.totalorder %s16, 1
      %p62 = por %p60, %p61
      %p64 = scmp.ne.s32.totalorder %s47, %s63
      %p65 = scmp.eq.s32.totalorder %s16, 0
      %p66 = por %p64, %p65
      %s67 = ssub.s32 %s17, %s36
      %s68 = ssub.s32 %s19, %s28
      %s69 = sor.u32 %s67, %s68
      %s70 = ssub.s32 %s18, %s32
      %s71 = sor.u32 %s69, %s70
      %p72 = scmp.eq.s32.totalorder %s71, 0
      %s74 = sadd.s32 %s73, 1
      %s75 = scalar_select %p72, %s73, %s74
      %p78 = pneg %p72
      %p79 = scmp.eq.s32.totalorder %s10, 1
      %p80 = por %p78, %p79
      %p81 = scmp.ne.s32.totalorder %s73, %s76
      %p82 = scmp.eq.s32.totalorder %s10, 0
      %p83 = por %p81, %p82
      %p84 = scmp.ne.s32.totalorder %s73, %s76
      %p85 = scmp.eq.s32.totalorder %s15, 1
      %p86 = por %p84, %p85
      %p87 = scmp.ne.s32.totalorder %s76, %s77
      %p88 = scmp.eq.s32.totalorder %s15, 0
      %p89 = por %p87, %p88
      %p90 = scmp.ne.s32.totalorder %s76, %s77
      %p91 = scmp.eq.s32.totalorder %s16, 1
      %p92 = por %p90, %p91
      %p94 = scmp.ne.s32.totalorder %s77, %s93
      %p95 = scmp.eq.s32.totalorder %s16, 0
      %p96 = por %p94, %p95
      %p97 = scmp.le.s32.totalorder 1, %s10
      %p98 = scmp.lt.s32.totalorder %s10, 3
      %p99 = pnand %p97, %p98
      %p100 = pneg %p99
      // Predicated region
      $region9: #{tpu_custom_call.1} parent=5 // pred_check
        _
      $region10: #{tpu_custom_call.1} parent=5 // pred_check_branch
        %102 = sbr.rel (%p99) target = $region12
      $region11: #{tpu_custom_call.1} parent=5 // pred_region
        %s103 = ssub.s32 %s10, 1
      $region12: #{tpu_custom_call.1} parent=5 // pred_fallthru
        _
      %p104 = scmp.lt.s32.totalorder %s10, 2
      // Predicated region
      $region13: #{tpu_custom_call.1} parent=5 // pred_check
        %p105 = pneg %p104
      $region14: #{tpu_custom_call.1} parent=5 // pred_check_branch
        %107 = sbr.rel (%p105) target = $region16
      $region15: #{tpu_custom_call.1} parent=5 // pred_region
        // Predicated region
        $region17: #{tpu_custom_call.1} parent=15 // pred_check
          %p108 = pneg %p53
        $region18: #{tpu_custom_call.1} parent=15 // pred_check_branch
          %110 = sbr.rel (%p108) target = $region20
        $region19: #{tpu_custom_call.1} parent=15 // pred_region
          %s111 = sand.u32 %s43, 1
          %s112 = scalar_lea.sflag [#allocation3], %s111
          %s113 = sand.u32 %s43, 1
          %s114 = smul.addr %s113, 8
          %s115 = scalar_lea.vmem [#allocation2], %s114
          %117 = vsyncadd %s112, 0
          %s118 = sadd.s32 %s19, %s18
          %s119 = sadd.s32 %s118, %s17
          %s120 = smul.addr %s119, 8
          %s121 = scalar_lea.hbm %s0, %s120
          %s123 = sshll.u32 %s121, 4
          %s124 = int_to_ptr.hbm [resolvable:$true] %s123
          %s125 = sshll.u32 %s115, 4
          %s126 = int_to_ptr.vmem [resolvable:$true] %s125
          %128 = dma.hbm_to_vmem [thread:$0]  %s124, 128, %s126, %s112
        $region20: #{tpu_custom_call.1} parent=15 // pred_fallthru
          _
      $region16: #{tpu_custom_call.1} parent=5 // pred_fallthru
        _
      %p129 = scmp.le.s32.totalorder 1, %s10
      %p130 = scmp.lt.s32.totalorder %s10, 3
      %p131 = pnand %p129, %p130
      %p132 = pneg %p131
      // Predicated region
      $region21: #{tpu_custom_call.1} parent=5 // pred_check
        _
      $region22: #{tpu_custom_call.1} parent=5 // pred_check_branch
        %134 = sbr.rel (%p131) target = $region24
      $region23: #{tpu_custom_call.1} parent=5 // pred_region
        %s135 = ssub.s32 %s10, 1
        %s136 = sand.u32 %s46, 1
        %s137 = scalar_lea.sflag [#allocation3], %s136
        %s138 = sand.u32 %s46, 1
        %s139 = smul.addr %s138, 8
        %s140 = scalar_lea.vmem [#allocation2], %s139
        // Predicated region
        $region25: #{tpu_custom_call.1} parent=23 // pred_check
          %p141 = pneg %p59
        $region26: #{tpu_custom_call.1} parent=23 // pred_check_branch
          %143 = sbr.rel (%p141) target = $region28
        $region27: #{tpu_custom_call.1} parent=23 // pred_region
          %145 = dma.done %s137, 128
        $region28: #{tpu_custom_call.1} parent=23 // pred_fallthru
          _
        %s146 = sand.u32 %s46, 1
        %s147 = scalar_lea.sflag [#allocation3], %s146
        %s148 = sand.u32 %s46, 1
        %s149 = smul.addr %s148, 8
        %s150 = scalar_lea.vmem [#allocation2], %s149
        %p151 = pneg %p59
        %p152 = pneg %p56
        %p153 = pneg %p89
        %p154 = pneg %p86
        %s155 = smul.u32 4, %s22
        %p156 = scmp.lt.s32.totalorder %s20, 1
        %s157 = scalar_select %p156, %s20, 1
        %p158 = scmp.lt.s32.totalorder %s155, 3
        %s159 = scalar_select %p158, %s155, 3
        %p160 = scmp.lt.s32.totalorder %s21, 0
        %s161 = scalar_select %p160, %s21, 0
        %s162 = sadd.s32 %s161, %s159
        %s163 = smul.addr %s157, 4
        %s164 = sadd.s32 %s162, %s163
        %s165 = smul.addr %s164, 8
        %s166 = scalar_lea.vmem %s1, %s165
        %s167 = smul.u32 4, %s22
        %p168 = scmp.lt.s32.totalorder %s20, 1
        %s169 = scalar_select %p168, %s20, 1
        %p170 = scmp.lt.s32.totalorder %s167, 3
        %s171 = scalar_select %p170, %s167, 3
        %p172 = scmp.lt.s32.totalorder %s21, 0
        %s173 = scalar_select %p172, %s21, 0
        %s174 = sadd.s32 %s173, %s171
        %s175 = smul.addr %s169, 4
        %s176 = sadd.s32 %s174, %s175
        %s177 = smul.addr %s176, 8
        %s178 = scalar_lea.vmem %s1, %s177
        %s179 = smul.u32 4, %s22
        %v180 = vld [vmem:[%s140] sm:$0xff]
        %181 = vxpose.xlu0.b32.start [1/16] %v180, 128
        %182 = vxpose.xlu0.b32.cont [2/16] 0.0, 128
        %183 = vxpose.xlu0.b32.cont [3/16] 0.0, 128
        %184 = vxpose.xlu0.b32.cont [4/16] 0.0, 128
        %185 = vxpose.xlu0.b32.cont [5/16] 0.0, 128
        %186 = vxpose.xlu0.b32.cont [6/16] 0.0, 128
        %187 = vxpose.xlu0.b32.cont [7/16] 0.0, 128
        %188 = vxpose.xlu0.b32.cont [8/16] 0.0, 128
        %189 = vxpose.xlu0.b32.cont [9/16] 0.0, 128
        %190 = vxpose.xlu0.b32.cont [10/16] 0.0, 128
        %191 = vxpose.xlu0.b32.cont [11/16] 0.0, 128
        %192 = vxpose.xlu0.b32.cont [12/16] 0.0, 128
        %193 = vxpose.xlu0.b32.cont [13/16] 0.0, 128
        %194 = vxpose.xlu0.b32.cont [14/16] 0.0, 128
        %195 = vxpose.xlu0.b32.cont [15/16] 0.0, 128
        %196 = vxpose.xlu0.b32.end [16/16] 0.0, 128
        %v197 = vpop.trf.xlu0
        %v198 = vpop.trf.xlu0
        %v199 = vpop.trf.xlu0
        %v200 = vpop.trf.xlu0
        %v201 = vpop.trf.xlu0
        %v202 = vpop.trf.xlu0
        %v203 = vpop.trf.xlu0
        %v204 = vpop.trf.xlu0
        %v205 = vpop.trf.xlu0
        %v206 = vpop.trf.xlu0
        %v207 = vpop.trf.xlu0
        %v208 = vpop.trf.xlu0
        %v209 = vpop.trf.xlu0
        %v210 = vpop.trf.xlu0
        %v211 = vpop.trf.xlu0
        %v212 = vpop.trf.xlu0
        %vm213 = vcmask 64512
        %214 = vst.msk [vmem:[%s178] sm:$0xff] %vm213, %v197
        %215 = vst.msk [vmem:[%s178 + $0x8] sm:$0xff] %vm213, %v198
        %216 = vst.msk [vmem:[%s178 + $0x10] sm:$0xff] %vm213, %v199
        %217 = vst.msk [vmem:[%s178 + $0x18] sm:$0xff] %vm213, %v200
        %s218 = smul.u32 4, %s22
        %p219 = scmp.lt.s32.totalorder %s20, 1
        %s220 = scalar_select %p219, %s20, 1
        %p221 = scmp.lt.s32.totalorder %s218, 3
        %s222 = scalar_select %p221, %s218, 3
        %p223 = scmp.lt.s32.totalorder %s21, 0
        %s224 = scalar_select %p223, %s21, 0
        %s225 = sadd.s32 %s224, %s222
        %s226 = smul.addr %s220, 4
        %s227 = sadd.s32 %s225, %s226
        %s228 = smul.addr %s227, 8
        %s229 = scalar_lea.vmem %s1, %s228
        // Predicated region
        $region29: #{tpu_custom_call.1} parent=23 // pred_check
          %p230 = pneg %p86
        $region30: #{tpu_custom_call.1} parent=23 // pred_check_branch
          %232 = sbr.rel (%p230) target = $region32
        $region31: #{tpu_custom_call.1} parent=23 // pred_region
          %s233 = smul.u32 4, %s22
        $region32: #{tpu_custom_call.1} parent=23 // pred_fallthru
          _
      $region24: #{tpu_custom_call.1} parent=5 // pred_fallthru
        _
      %p234 = scmp.le.s32.totalorder 2, %s10
      // Predicated region
      $region33: #{tpu_custom_call.1} parent=5 // pred_check
        %p235 = pneg %p234
      $region34: #{tpu_custom_call.1} parent=5 // pred_check_branch
        %237 = sbr.rel (%p235) target = $region36
      $region35: #{tpu_custom_call.1} parent=5 // pred_region
        %s238 = ssub.s32 %s10, 2
        // Predicated region
        $region37: #{tpu_custom_call.1} parent=35 // pred_check
          %p239 = pneg %p92
        $region38: #{tpu_custom_call.1} parent=35 // pred_check_branch
          %241 = sbr.rel (%p239) target = $region40
        $region39: #{tpu_custom_call.1} parent=35 // pred_region
          %s242 = smul.u32 4, %s25
          %p243 = scmp.lt.s32.totalorder %s23, 1
          %s244 = scalar_select %p243, %s23, 1
          %p245 = scmp.lt.s32.totalorder %s242, 3
          %s246 = scalar_select %p245, %s242, 3
          %p247 = scmp.lt.s32.totalorder %s24, 0
          %s248 = scalar_select %p247, %s24, 0
          %s249 = sadd.s32 %s248, %s246
          %s250 = smul.addr %s244, 4
          %s251 = sadd.s32 %s249, %s250
          %s252 = smul.addr %s251, 8
          %s253 = scalar_lea.vmem %s1, %s252
        $region40: #{tpu_custom_call.1} parent=35 // pred_fallthru
          _
      $region36: #{tpu_custom_call.1} parent=5 // pred_fallthru
        _
    $region6: #{tpu_custom_call.1} parent=1 // loop_footer
      %s14 = sadd.s32 1, %s10
    $region7: #{tpu_custom_call.1} parent=1 // loop_footer_branch
      %9 = sbr.rel target = $region3
    $region8: #{tpu_custom_call.1} parent=1 // loop_exit
      _
    %254 = vsyncpa [#allocation3], 1
    %s255 = scalar_lea.sflag [#allocation3], 1
    %256 = vsyncpa %s255, 1

</llo_original>
